<compile_context>
chip_gen: v7x
topology: tpu7x:2x2x1
jax: 0.10.0
libtpu: 0.0.40
codegen_flags: <defaults>
</compile_context>

<pallas_src>
import functools

import jax
import jax.numpy as jnp
from jax.experimental import pallas as pl
from jax.experimental.pallas import tpu as pltpu

NEG_SLOPE = 0.0   # LeakyReLU(negative_slope=0.0) module default
DROPOUT_P = 0.1   # eval-mode dropout == identity


def _round_up(x, m):
    return ((x + m - 1) // m) * m


def densefc2_kernel(x_ref, w1_ref, b1_ref, w2_ref, b2_ref, o_ref, *, neg_slope):
    # fc1: [TM, F_in] @ [F_in, H] -> f32 accumulate, bias + activation in f32.
    h = jnp.dot(x_ref[...], w1_ref[...], preferred_element_type=jnp.float32)
    h = h + b1_ref[...]
    if neg_slope == 0.0:
        h = jnp.maximum(h, 0.0)               # single vmax instead of cmp/mul/select
    else:
        h = jnp.where(h >= 0, h, neg_slope * h)
    # Dropout: identity in eval mode.
    # fc2: [TM, H] @ [H, F_out_p] -> f32 accumulate, bias in f32.
    out = jnp.dot(h.astype(w2_ref.dtype), w2_ref[...],
                  preferred_element_type=jnp.float32)
    out = out + b2_ref[...]
    o_ref[...] = out.astype(o_ref.dtype)


def densefc2_forward(x, w1_t, b1, w2_t, b2, *, neg_slope=NEG_SLOPE,
                     compute_dtype=jnp.bfloat16, block_m=None):
    """x: [B, F_in]; w1_t: [F_in, H]; b1: [1, H]; w2_t: [H, F_out]; b2: [1, F_out]."""
    B, F_in = x.shape
    H = w1_t.shape[1]
    F_out = w2_t.shape[1]
    out_dtype = x.dtype

    # Lane-dense output: pad F_out up to a multiple of 128 (unmasked vst).
    F_out_p = _round_up(F_out, 128)
    if F_out_p != F_out:
        w2_t = jnp.pad(w2_t, ((0, 0), (0, F_out_p - F_out)))
        b2 = jnp.pad(b2, ((0, 0), (0, F_out_p - F_out)))

    # Batch tiling: big tiles when the batch allows; tiny batches get one tile.
    if block_m is None:
        block_m = 128 if B >= 128 else _round_up(max(B, 1), 16)
    B_p = _round_up(B, block_m)
    if B_p != B:
        x = jnp.pad(x, ((0, B_p - B), (0, 0)))

    # bf16 matmul inputs (MXU fast path), f32 biases / accumulation.
    xc = x.astype(compute_dtype)
    w1c = w1_t.astype(compute_dtype)
    w2c = w2_t.astype(compute_dtype)
    b1f = b1.astype(jnp.float32)
    b2f = b2.astype(jnp.float32)

    kernel = functools.partial(densefc2_kernel, neg_slope=float(neg_slope))
    out = pl.pallas_call(
        kernel,
        out_shape=jax.ShapeDtypeStruct((B_p, F_out_p), out_dtype),
        grid=(B_p // block_m,),
        in_specs=[
            pl.BlockSpec((block_m, F_in), lambda i: (i, 0)),   # x tile
            pl.BlockSpec((F_in, H), lambda i: (0, 0)),         # W1 resident
            pl.BlockSpec((1, H), lambda i: (0, 0)),            # b1 resident
            pl.BlockSpec((H, F_out_p), lambda i: (0, 0)),      # W2 resident
            pl.BlockSpec((1, F_out_p), lambda i: (0, 0)),      # b2 resident
        ],
        out_specs=pl.BlockSpec((block_m, F_out_p), lambda i: (i, 0)),
        compiler_params=pltpu.CompilerParams(
            dimension_semantics=("parallel",)),                # megacore on v7x
    )(xc, w1c, b1f, w2c, b2f)
    return out[:B, :F_out]


def init_params(key, input_size, hidden_size, output_size, dtype=jnp.float32):
    """Deterministic init mimicking torch.nn.Linear (uniform ±1/sqrt(fan_in))."""
    k1, k2, k3, k4 = jax.random.split(key, 4)
    bound1 = 1.0 / (input_size ** 0.5)
    bound2 = 1.0 / (hidden_size ** 0.5)
    # Stored pre-transposed: [in, out]
    w1_t = jax.random.uniform(k1, (input_size, hidden_size), dtype,
                              minval=-bound1, maxval=bound1)
    b1 = jax.random.uniform(k2, (1, hidden_size), dtype,
                            minval=-bound1, maxval=bound1)
    w2_t = jax.random.uniform(k3, (hidden_size, output_size), dtype,
                              minval=-bound2, maxval=bound2)
    b2 = jax.random.uniform(k4, (1, output_size), dtype,
                            minval=-bound2, maxval=bound2)
    return w1_t, b1, w2_t, b2


def reference_forward(x, w1_t, b1, w2_t, b2, neg_slope=NEG_SLOPE,
                      compute_dtype=jnp.bfloat16):
    """Pure-JAX reference using the same bf16-input / f32-accumulate recipe."""
    h = jnp.dot(x.astype(compute_dtype), w1_t.astype(compute_dtype),
                preferred_element_type=jnp.float32) + b1.astype(jnp.float32)
    h = jnp.where(h >= 0, h, neg_slope * h)
    out = jnp.dot(h.astype(compute_dtype), w2_t.astype(compute_dtype),
                  preferred_element_type=jnp.float32) + b2.astype(jnp.float32)
    return out.astype(x.dtype)


if __name__ == "__main__":
    batch = 256          # multiple batch tiles -> exercises pipelining / parallel grid
    input_size = 32
    hidden_size = 256
    output_size = 16

    key = jax.random.PRNGKey(0)
    kx, kp = jax.random.split(key)
    x = jax.random.normal(kx, (batch, input_size), dtype=jnp.float32)
    w1_t, b1, w2_t, b2 = init_params(kp, input_size, hidden_size, output_size)

    out = densefc2_forward(x, w1_t, b1, w2_t, b2)
    out = jax.block_until_ready(out)

    ref = reference_forward(x, w1_t, b1, w2_t, b2)
    assert out.shape == (batch, output_size)
    assert jnp.allclose(out, ref, atol=2e-2, rtol=2e-2), (
        float(jnp.max(jnp.abs(out - ref))))

    print("KERNEL_OK")
</pallas_src>

<mosaic_0001>
module attributes {stable_mosaic.version = 11 : i64} {
  func.func @densefc2_kernel(%arg0: i32, %arg1: memref<128x32xbf16, #tpu.memory_space<vmem>>, %arg2: memref<32x256xbf16, #tpu.memory_space<vmem>>, %arg3: memref<1x256xf32, #tpu.memory_space<vmem>>, %arg4: memref<256x128xbf16, #tpu.memory_space<vmem>>, %arg5: memref<1x128xf32, #tpu.memory_space<vmem>>, %arg6: memref<128x128xf32, #tpu.memory_space<vmem>>) attributes {dimension_semantics = [#tpu.dimension_semantics<parallel>], iteration_bounds = array<i64: 2>, scalar_prefetch = 0 : i64, scratch_operands = 0 : i64, tpu.core_type = #tpu.core_type<tc>, window_params = [{transform_indices = @transform_0, window_bounds = array<i64: 128, 32>}, {pipeline_mode = #tpu.pipeline_mode<synchronous>, transform_indices = @transform_1, window_bounds = array<i64: 32, 256>}, {pipeline_mode = #tpu.pipeline_mode<synchronous>, transform_indices = @transform_2, window_bounds = array<i64: 1, 256>}, {pipeline_mode = #tpu.pipeline_mode<synchronous>, transform_indices = @transform_3, window_bounds = array<i64: 256, 128>}, {pipeline_mode = #tpu.pipeline_mode<synchronous>, transform_indices = @transform_4, window_bounds = array<i64: 1, 128>}, {transform_indices = @transform_5, window_bounds = array<i64: 128, 128>}]} {
    %c0 = arith.constant 0 : index
    %c0_0 = arith.constant 0 : index
    %0 = vector.load %arg1[%c0, %c0_0] : memref<128x32xbf16, #tpu.memory_space<vmem>>, vector<128x32xbf16>
    %c0_1 = arith.constant 0 : index
    %c0_2 = arith.constant 0 : index
    %1 = vector.load %arg2[%c0_1, %c0_2] : memref<32x256xbf16, #tpu.memory_space<vmem>>, vector<32x256xbf16>
    %cst = arith.constant dense<0.000000e+00> : vector<128x256xf32>
    %2 = tpu.matmul %0, %1, %cst {dimension_numbers = #tpu.dot_dimension_numbers<[1], [0], [0], [1], [0, 0, 1, 1], [], []>} : vector<128x32xbf16>, vector<32x256xbf16>, vector<128x256xf32> -> vector<128x256xf32>
    %c0_3 = arith.constant 0 : index
    %c0_4 = arith.constant 0 : index
    %3 = vector.load %arg3[%c0_3, %c0_4] : memref<1x256xf32, #tpu.memory_space<vmem>>, vector<1x256xf32>
    %4 = vector.broadcast %3 : vector<1x256xf32> to vector<128x256xf32>
    %5 = arith.addf %2, %4 : vector<128x256xf32>
    %cst_5 = arith.constant 0.000000e+00 : f32
    %6 = vector.broadcast %cst_5 : f32 to vector<128x256xf32>
    %7 = arith.maximumf %5, %6 : vector<128x256xf32>
    %8 = arith.truncf %7 : vector<128x256xf32> to vector<128x256xbf16>
    %c0_6 = arith.constant 0 : index
    %c0_7 = arith.constant 0 : index
    %9 = vector.load %arg4[%c0_6, %c0_7] : memref<256x128xbf16, #tpu.memory_space<vmem>>, vector<256x128xbf16>
    %cst_8 = arith.constant dense<0.000000e+00> : vector<128x128xf32>
    %10 = tpu.matmul %8, %9, %cst_8 {dimension_numbers = #tpu.dot_dimension_numbers<[1], [0], [0], [1], [0, 0, 1, 1], [], []>} : vector<128x256xbf16>, vector<256x128xbf16>, vector<128x128xf32> -> vector<128x128xf32>
    %c0_9 = arith.constant 0 : index
    %c0_10 = arith.constant 0 : index
    %11 = vector.load %arg5[%c0_9, %c0_10] : memref<1x128xf32, #tpu.memory_space<vmem>>, vector<1x128xf32>
    %12 = vector.broadcast %11 : vector<1x128xf32> to vector<128x128xf32>
    %13 = arith.addf %10, %12 : vector<128x128xf32>
    %c0_11 = arith.constant 0 : index
    %c0_12 = arith.constant 0 : index
    %14 = vector.load %arg6[%c0_11, %c0_12] : memref<128x128xf32, #tpu.memory_space<vmem>>, vector<128x128xf32>
    tpu.vector_store %arg6[%c0_11, %c0_12], %13 {strides = array<i32>} : memref<128x128xf32, #tpu.memory_space<vmem>>, vector<128x128xf32>,
    return
  }
  func.func @transform_0(%arg0: i32) -> (i32, i32) {
    %c0_i32 = arith.constant 0 : i32
    %c0_i32_0 = arith.constant 0 : i32
    return %arg0, %c0_i32 : i32, i32
  }
  func.func @transform_1(%arg0: i32) -> (i32, i32) {
    %c0_i32 = arith.constant 0 : i32
    %c0_i32_0 = arith.constant 0 : i32
    %c0_i32_1 = arith.constant 0 : i32
    return %c0_i32, %c0_i32_0 : i32, i32
  }
  func.func @transform_2(%arg0: i32) -> (i32, i32) {
    %c0_i32 = arith.constant 0 : i32
    %c0_i32_0 = arith.constant 0 : i32
    %c0_i32_1 = arith.constant 0 : i32
    return %c0_i32, %c0_i32_0 : i32, i32
  }
  func.func @transform_3(%arg0: i32) -> (i32, i32) {
    %c0_i32 = arith.constant 0 : i32
    %c0_i32_0 = arith.constant 0 : i32
    %c0_i32_1 = arith.constant 0 : i32
    return %c0_i32, %c0_i32_0 : i32, i32
  }
  func.func @transform_4(%arg0: i32) -> (i32, i32) {
    %c0_i32 = arith.constant 0 : i32
    %c0_i32_0 = arith.constant 0 : i32
    %c0_i32_1 = arith.constant 0 : i32
    return %c0_i32, %c0_i32_0 : i32, i32
  }
  func.func @transform_5(%arg0: i32) -> (i32, i32) {
    %c0_i32 = arith.constant 0 : i32
    %c0_i32_0 = arith.constant 0 : i32
    return %arg0, %c0_i32 : i32, i32
  }
}

</mosaic_0001>

<llo_original>
// kernel: tpu_custom_call.1
$region0: #{tpu_custom_call.1}
  #allocation0 [shape = 'u32[]', space=smem, size = 0x4, offset = 0x4, fixed_abs, tag = 'smem constant byte address 0x4 - core index']
  #allocation1 [shape = 'u32[144,128]{1,0:T(1,128)}', space=vmem, size = 0x12000, scoped, tag = 'internal scratch']
  %s0 = inlined_call_operand.vmem [shape: bf16[256,32], index: 0, kind: input, shape index: {}]
  %s1 = inlined_call_operand.vmem [shape: bf16[32,256], index: 1, kind: input, shape index: {}]
  %s2 = inlined_call_operand.vmem [shape: f32[1,256], index: 2, kind: input, shape index: {}]
  %s3 = inlined_call_operand.vmem [shape: bf16[256,128], index: 3, kind: input, shape index: {}]
  %s4 = inlined_call_operand.vmem [shape: f32[1,128], index: 4, kind: input, shape index: {}]
  %s5 = inlined_call_operand.hbm [shape: f32[256,128], index: 5, kind: output, shape index: {}]
  %s6 = sld [smem:[#allocation0]]
  $region53: #{tpu_custom_call.1} parent=0
    _
  %s8 = ssub.s32 1, %s6
  %s9 = scalar_select 0, %s8, %s6
  $region1: #{tpu_custom_call.1} parent=0
    #allocation2 [shape = 'u8[131072]{0}', space=vmem, size = 0x20000, scoped, tag = 'output window, operand 0']
    #allocation3 [shape = 's32[2]{0}', space=sflag, size = 0x8, scoped, tag = 'scoped memory for tpu_custom_call.1']
    %10 = vsyncpa [#allocation3], 0
    %s11 = scalar_lea.sflag [#allocation3], 1
    %12 = vsyncpa %s11, 0
    loop: start=0, step=1, limit=4
    $region2: #{tpu_custom_call.1} parent=1 // loop_pre_header
      _
    $region3: #{tpu_custom_call.1} parent=1 // loop_header
      %s14 = sphi 0, %s18
      %p15 = scmp.ge.s32.totalorder %s14, 4
      %s24 = sphi 0, %s26
      %s27 = sphi 0, %s24
      %s28 = sphi 0, %s27
      %s44 = sphi 0, %s28
      %s48 = sphi 0, %s48
      %s50 = sphi 0, %s48
      %s51 = sphi 0, %s50
      %s65 = sphi 0, %s51
      %s69 = sphi 0, %s69
      %s71 = sphi 0, %s69
      %s72 = sphi 0, %s71
      %s86 = sphi 0, %s72
      %s90 = sphi 0, %s90
      %s92 = sphi 0, %s90
      %s93 = sphi 0, %s92
      %s107 = sphi 0, %s93
      %s111 = sphi 0, %s111
      %s113 = sphi 0, %s111
      %s114 = sphi 0, %s113
      %s128 = sphi 0, %s114
      %s134 = sphi 0, %s136
      %s137 = sphi 0, %s134
      %s138 = sphi 0, %s137
      %s154 = sphi 0, %s138
    $region4: #{tpu_custom_call.1} parent=1 // loop_header_branch
      %17 = sbr.rel (%p15) target = $region8
    $region5: #{tpu_custom_call.1} parent=1 // loop_body
      %s19 = ssub.s32 %s14, 1
      %s20 = ssub.s32 %s14, 2
      %s21 = sadd.s32 %s14, 1
      %s22 = ssub.s32 %s14, %s21
      %p23 = scmp.eq.s32.totalorder %s22, 0
      %s25 = sadd.s32 %s24, 1
      %s26 = scalar_select %p23, %s24, %s25
      %p29 = pneg %p23
      %p30 = scmp.eq.s32.totalorder %s14, 1
      %p31 = por %p29, %p30
      %p32 = scmp.ne.s32.totalorder %s24, %s27
      %p33 = scmp.eq.s32.totalorder %s14, 0
      %p34 = por %p32, %p33
      %p35 = scmp.ne.s32.totalorder %s24, %s27
      %p36 = scmp.eq.s32.totalorder %s19, 1
      %p37 = por %p35, %p36
      %p38 = scmp.ne.s32.totalorder %s27, %s28
      %p39 = scmp.eq.s32.totalorder %s19, 0
      %p40 = por %p38, %p39
      %p41 = scmp.ne.s32.totalorder %s27, %s28
      %p42 = scmp.eq.s32.totalorder %s20, 1
      %p43 = por %p41, %p42
      %p45 = scmp.ne.s32.totalorder %s28, %s44
      %p46 = scmp.eq.s32.totalorder %s20, 0
      %p47 = por %p45, %p46
      %s49 = sadd.s32 %s48, 1
      %p52 = scmp.eq.s32.totalorder %s14, 1
      %p53 = scmp.ne.s32.totalorder %s48, %s50
      %p54 = scmp.eq.s32.totalorder %s14, 0
      %p55 = por %p53, %p54
      %p56 = scmp.ne.s32.totalorder %s48, %s50
      %p57 = scmp.eq.s32.totalorder %s19, 1
      %p58 = por %p56, %p57
      %p59 = scmp.ne.s32.totalorder %s50, %s51
      %p60 = scmp.eq.s32.totalorder %s19, 0
      %p61 = por %p59, %p60
      %p62 = scmp.ne.s32.totalorder %s50, %s51
      %p63 = scmp.eq.s32.totalorder %s20, 1
      %p64 = por %p62, %p63
      %p66 = scmp.ne.s32.totalorder %s51, %s65
      %p67 = scmp.eq.s32.totalorder %s20, 0
      %p68 = por %p66, %p67
      %s70 = sadd.s32 %s69, 1
      %p73 = scmp.eq.s32.totalorder %s14, 1
      %p74 = scmp.ne.s32.totalorder %s69, %s71
      %p75 = scmp.eq.s32.totalorder %s14, 0
      %p76 = por %p74, %p75
      %p77 = scmp.ne.s32.totalorder %s69, %s71
      %p78 = scmp.eq.s32.totalorder %s19, 1
      %p79 = por %p77, %p78
      %p80 = scmp.ne.s32.totalorder %s71, %s72
      %p81 = scmp.eq.s32.totalorder %s19, 0
      %p82 = por %p80, %p81
      %p83 = scmp.ne.s32.totalorder %s71, %s72
      %p84 = scmp.eq.s32.totalorder %s20, 1
      %p85 = por %p83, %p84
      %p87 = scmp.ne.s32.totalorder %s72, %s86
      %p88 = scmp.eq.s32.totalorder %s20, 0
      %p89 = por %p87, %p88
      %s91 = sadd.s32 %s90, 1
      %p94 = scmp.eq.s32.totalorder %s14, 1
      %p95 = scmp.ne.s32.totalorder %s90, %s92
      %p96 = scmp.eq.s32.totalorder %s14, 0
      %p97 = por %p95, %p96
      %p98 = scmp.ne.s32.totalorder %s90, %s92
      %p99 = scmp.eq.s32.totalorder %s19, 1
      %p100 = por %p98, %p99
      %p101 = scmp.ne.s32.totalorder %s92, %s93
      %p102 = scmp.eq.s32.totalorder %s19, 0
      %p103 = por %p101, %p102
      %p104 = scmp.ne.s32.totalorder %s92, %s93
      %p105 = scmp.eq.s32.totalorder %s20, 1
      %p106 = por %p104, %p105
      %p108 = scmp.ne.s32.totalorder %s93, %s107
      %p109 = scmp.eq.s32.totalorder %s20, 0
      %p110 = por %p108, %p109
      %s112 = sadd.s32 %s111, 1
      %p115 = scmp.eq.s32.totalorder %s14, 1
      %p116 = scmp.ne.s32.totalorder %s111, %s113
      %p117 = scmp.eq.s32.totalorder %s14, 0
      %p118 = por %p116, %p117
      %p119 = scmp.ne.s32.totalorder %s111, %s113
      %p120 = scmp.eq.s32.totalorder %s19, 1
      %p121 = por %p119, %p120
      %p122 = scmp.ne.s32.totalorder %s113, %s114
      %p123 = scmp.eq.s32.totalorder %s19, 0
      %p124 = por %p122, %p123
      %p125 = scmp.ne.s32.totalorder %s113, %s114
      %p126 = scmp.eq.s32.totalorder %s20, 1
      %p127 = por %p125, %p126
      %p129 = scmp.ne.s32.totalorder %s114, %s128
      %p130 = scmp.eq.s32.totalorder %s20, 0
      %p131 = por %p129, %p130
      %s132 = ssub.s32 %s14, %s21
      %p133 = scmp.eq.s32.totalorder %s132, 0
      %s135 = sadd.s32 %s134, 1
      %s136 = scalar_select %p133, %s134, %s135
      %p139 = pneg %p133
      %p140 = scmp.eq.s32.totalorder %s14, 1
      %p141 = por %p139, %p140
      %p142 = scmp.ne.s32.totalorder %s134, %s137
      %p143 = scmp.eq.s32.totalorder %s14, 0
      %p144 = por %p142, %p143
      %p145 = scmp.ne.s32.totalorder %s134, %s137
      %p146 = scmp.eq.s32.totalorder %s19, 1
      %p147 = por %p145, %p146
      %p148 = scmp.ne.s32.totalorder %s137, %s138
      %p149 = scmp.eq.s32.totalorder %s19, 0
      %p150 = por %p148, %p149
      %p151 = scmp.ne.s32.totalorder %s137, %s138
      %p152 = scmp.eq.s32.totalorder %s20, 1
      %p153 = por %p151, %p152
      %p155 = scmp.ne.s32.totalorder %s138, %s154
      %p156 = scmp.eq.s32.totalorder %s20, 0
      %p157 = por %p155, %p156
      %p158 = scmp.le.s32.totalorder 1, %s14
      %p159 = scmp.lt.s32.totalorder %s14, 3
      %p160 = pnand %p158, %p159
      %p161 = pneg %p160
      // Predicated region
      $region9: #{tpu_custom_call.1} parent=5 // pred_check
        _
      $region10: #{tpu_custom_call.1} parent=5 // pred_check_branch
        %163 = sbr.rel (%p160) target = $region12
      $region11: #{tpu_custom_call.1} parent=5 // pred_region
        %s164 = ssub.s32 %s14, 1
        // Predicated region
        $region13: #{tpu_custom_call.1} parent=11 // pred_check
          %p165 = pneg %p61
        $region14: #{tpu_custom_call.1} parent=11 // pred_check_branch
          %167 = sbr.rel (%p165) target = $region16
        $region15: #{tpu_custom_call.1} parent=11 // pred_region
          _
        $region16: #{tpu_custom_call.1} parent=11 // pred_fallthru
          _
        // Predicated region
        $region17: #{tpu_custom_call.1} parent=11 // pred_check
          %p168 = pneg %p82
        $region18: #{tpu_custom_call.1} parent=11 // pred_check_branch
          %170 = sbr.rel (%p168) target = $region20
        $region19: #{tpu_custom_call.1} parent=11 // pred_region
          _
        $region20: #{tpu_custom_call.1} parent=11 // pred_fallthru
          _
        // Predicated region
        $region21: #{tpu_custom_call.1} parent=11 // pred_check
          %p171 = pneg %p103
        $region22: #{tpu_custom_call.1} parent=11 // pred_check_branch
          %173 = sbr.rel (%p171) target = $region24
        $region23: #{tpu_custom_call.1} parent=11 // pred_region
          _
        $region24: #{tpu_custom_call.1} parent=11 // pred_fallthru
          _
        // Predicated region
        $region25: #{tpu_custom_call.1} parent=11 // pred_check
          %p174 = pneg %p124
        $region26: #{tpu_custom_call.1} parent=11 // pred_check_branch
          %176 = sbr.rel (%p174) target = $region28
        $region27: #{tpu_custom_call.1} parent=11 // pred_region
          _
        $region28: #{tpu_custom_call.1} parent=11 // pred_fallthru
          _
      $region12: #{tpu_custom_call.1} parent=5 // pred_fallthru
        _
      %p177 = scmp.lt.s32.totalorder %s14, 2
      // Predicated region
      $region29: #{tpu_custom_call.1} parent=5 // pred_check
        %p178 = pneg %p177
      $region30: #{tpu_custom_call.1} parent=5 // pred_check_branch
        %180 = sbr.rel (%p178) target = $region32
      $region31: #{tpu_custom_call.1} parent=5 // pred_region
        // Predicated region
        $region33: #{tpu_custom_call.1} parent=31 // pred_check
          %p181 = pneg %p34
        $region34: #{tpu_custom_call.1} parent=31 // pred_check_branch
          %183 = sbr.rel (%p181) target = $region36
        $region35: #{tpu_custom_call.1} parent=31 // pred_region
          %s184 = smul.u32 16, %s14
          %p185 = scmp.lt.s32.totalorder %s184, 31
          %s186 = scalar_select %p185, %s184, 31
          %s187 = smul.addr %s186, 4
          %s188 = scalar_lea.vmem %s0, %s187
          %s189 = smul.u32 16, %s14
        $region36: #{tpu_custom_call.1} parent=31 // pred_fallthru
          _
      $region32: #{tpu_custom_call.1} parent=5 // pred_fallthru
        _
      %p190 = scmp.le.s32.totalorder 1, %s14
      %p191 = scmp.lt.s32.totalorder %s14, 3
      %p192 = pnand %p190, %p191
      %p193 = pneg %p192
      // Predicated region
      $region37: #{tpu_custom_call.1} parent=5 // pred_check
        _
      $region38: #{tpu_custom_call.1} parent=5 // pred_check_branch
        %195 = sbr.rel (%p192) target = $region40
      $region39: #{tpu_custom_call.1} parent=5 // pred_region
        %s196 = ssub.s32 %s14, 1
        %s197 = smul.u32 16, %s19
        %p198 = scmp.lt.s32.totalorder %s197, 31
        %s199 = scalar_select %p198, %s197, 31
        %s200 = smul.addr %s199, 4
        %s201 = scalar_lea.vmem %s0, %s200
        %p202 = pneg %p40
        %p203 = pneg %p37
        %p204 = pneg %p61
        %p205 = pneg %p58
        %p206 = pneg %p82
        %p207 = pneg %p79
        %p208 = pneg %p103
        %p209 = pneg %p100
        %p210 = pneg %p124
        %p211 = pneg %p121
        %p212 = pneg %p150
        %p213 = pneg %p147
        %s214 = sand.u32 %s137, 1
        %s215 = scalar_lea.sflag [#allocation3], %s214
        %s216 = sand.u32 %s137, 1
        %s217 = smul.addr %s216, 128
        %s218 = scalar_lea.vmem [#allocation2], %s217
        %s219 = smul.u32 16, %s19
        %p220 = scmp.lt.s32.totalorder %s219, 31
        %s221 = scalar_select %p220, %s219, 31
        %s222 = smul.addr %s221, 4
        %s223 = scalar_lea.vmem %s0, %s222
        %s224 = smul.u32 16, %s19
        %s225 = smul.u32 16, %s19
        %v227 = vld [vmem:[%s223] sm:$0xf]
        %v228 = vld [vmem:[%s223 + $0x4] sm:$0xf]
        %v229 = vld [vmem:[%s223 + $0x8] sm:$0xf]
        %v230 = vld [vmem:[%s223 + $0xc] sm:$0xf]
        %v231 = vld [vmem:[%s223 + $0x10] sm:$0xf]
        %v232 = vld [vmem:[%s223 + $0x14] sm:$0xf]
        %v233 = vld [vmem:[%s223 + $0x18] sm:$0xf]
        %v234 = vld [vmem:[%s223 + $0x1c] sm:$0xf]
        %v235 = vld [vmem:[%s223 + $0x20] sm:$0xf]
        %v236 = vld [vmem:[%s223 + $0x24] sm:$0xf]
        %v237 = vld [vmem:[%s223 + $0x28] sm:$0xf]
        %v238 = vld [vmem:[%s223 + $0x2c] sm:$0xf]
        %v239 = vld [vmem:[%s223 + $0x30] sm:$0xf]
        %v240 = vld [vmem:[%s223 + $0x34] sm:$0xf]
        %v241 = vld [vmem:[%s223 + $0x38] sm:$0xf]
        %v242 = vld [vmem:[%s223 + $0x3c] sm:$0xf]
        %v243 = vld [vmem:[%s1] sm:$0xff]
        %v244 = vld [vmem:[%s1 + $0x8] sm:$0xff]
        %v245 = vld [vmem:[%s1 + $0x10] sm:$0xff]
        %v246 = vld [vmem:[%s1 + $0x18] sm:$0xff]
        %v247 = vld [vmem:[%s2] sm:$0x3]
        %v249 = vlaneseq
        %v250 = vshrl.u32 %v249, 7
        %v251 = vsub.s32 0, %v250
        %v252 = vrot.slane %v247, %v251
        %v253 = vlaneseq
        %v254 = vshrl.u32 %v253, 7
        %v255 = vsub.s32 1, %v254
        %v256 = vrot.slane %v247, %v255
        %v275 = vunpack.c.l.b16 %v227
        %v276 = vunpack.c.l.b16 %v228
        %v277 = vunpack.c.l.b16 %v229
        %v278 = vunpack.c.l.b16 %v230
        %v279 = vunpack.c.l.b16 %v231
        %v280 = vunpack.c.l.b16 %v232
        %v281 = vunpack.c.l.b16 %v233
        %v282 = vunpack.c.l.b16 %v234
        %v283 = vunpack.c.l.b16 %v235
        %v284 = vunpack.c.l.b16 %v236
        %v285 = vunpack.c.l.b16 %v237
        %v286 = vunpack.c.l.b16 %v238
        %v287 = vunpack.c.l.b16 %v239
        %v288 = vunpack.c.l.b16 %v240
        %v289 = vunpack.c.l.b16 %v241
        %v290 = vunpack.c.l.b16 %v242
        %v291 = vpack.c.b16 %v276, %v275
        %v292 = vpack.c.b16 %v278, %v277
        %v293 = vpack.c.b16 %v280, %v279
        %v294 = vpack.c.b16 %v282, %v281
        %v295 = vpack.c.b16 %v284, %v283
        %v296 = vpack.c.b16 %v286, %v285
        %v297 = vpack.c.b16 %v288, %v287
        %v298 = vpack.c.b16 %v290, %v289
        %v303 = vunpack.c.l.b16 %v243
        %v304 = vunpack.c.h.b16 %v243
        %v305 = vunpack.c.l.b16 %v244
        %v306 = vunpack.c.h.b16 %v244
        %v307 = vunpack.c.l.b16 %v245
        %v308 = vunpack.c.h.b16 %v245
        %v309 = vunpack.c.l.b16 %v246
        %v310 = vunpack.c.h.b16 %v246
        %v311 = vpack.c.b16 %v305, %v303
        %v312 = vpack.c.b16 %v306, %v304
        %v313 = vpack.c.b16 %v309, %v307
        %v314 = vpack.c.b16 %v310, %v308
        %vm319 = vcmask 261120
        %v321 = vsel %vm319, %v291, 0
        %v324 = vsel %vm319, %v292, 0
        %v327 = vsel %vm319, %v293, 0
        %v330 = vsel %vm319, %v294, 0
        %v333 = vsel %vm319, %v295, 0
        %v336 = vsel %vm319, %v296, 0
        %v339 = vsel %vm319, %v297, 0
        %v342 = vsel %vm319, %v298, 0
        %344 = vmatprep.subr.bf16.mxu0 %v312
        %345 = vmatpush1.bf16.msra.mxu0 %v311
        %346 = vmatprep.subr.bf16.mxu0 %v314
        %347 = vmatpush1.bf16.msra.mxu0 %v313
        %348 = vmatprep.subr.bf16.mxu0 0
        %349 = vmatpush1.bf16.msra.mxu0 0
        %350 = vmatprep.subr.bf16.mxu0 0
        %351 = vmatpush1.bf16.msra.mxu0 0
        %352 = vmatprep.subr.bf16.mxu0 0
        %353 = vmatpush1.bf16.msra.mxu0 0
        %354 = vmatprep.subr.bf16.mxu0 0
        %355 = vmatpush1.bf16.msra.mxu0 0
        %356 = vmatprep.subr.bf16.mxu0 0
        %357 = vmatpush1.bf16.msra.mxu0 0
        %358 = vmatprep.subr.bf16.mxu0 0
        %359 = vmatpush1.bf16.msra.mxu0 0
        %360 = vmatprep.subr.bf16.mxu0 0
        %361 = vmatpush1.bf16.msra.mxu0 0
        %362 = vmatprep.subr.bf16.mxu0 0
        %363 = vmatpush1.bf16.msra.mxu0 0
        %364 = vmatprep.subr.bf16.mxu0 0
        %365 = vmatpush1.bf16.msra.mxu0 0
        %366 = vmatprep.subr.bf16.mxu0 0
        %367 = vmatpush1.bf16.msra.mxu0 0
        %368 = vmatprep.subr.bf16.mxu0 0
        %369 = vmatpush1.bf16.msra.mxu0 0
        %370 = vmatprep.subr.bf16.mxu0 0
        %371 = vmatpush1.bf16.msra.mxu0 0
        %372 = vmatprep.subr.bf16.mxu0 0
        %373 = vmatpush1.bf16.msra.mxu0 0
        %374 = vmatprep.subr.bf16.mxu0 0
        %375 = vmatpush1.bf16.msra.mxu0 0
        %376 = vmatprep.mubr.bf16.mxu0 0
        %377 = vmatmul.mubr.bf16.gmra.mrb[0].mxu0 %v321
        %v378 = vpop.f32.mrb[0].mxu0
        %v379 = vadd.f32 %v252, %v378
        %v380 = vpop.f32.mrb[0].mxu0
        %v381 = vadd.f32 %v256, %v380
        %v382 = vpop.f32.mrb[0].mxu0
        %v383 = vadd.f32 %v252, %v382
        %v384 = vpop.f32.mrb[0].mxu0
        %v385 = vadd.f32 %v256, %v384
        %386 = vmatprep.mubr.bf16.mxu0 0
        %387 = vmatmul.mubr.bf16.gmra.mrb[0].mxu0 %v324
        %v388 = vpop.f32.mrb[0].mxu0
        %v389 = vadd.f32 %v252, %v388
        %v390 = vpop.f32.mrb[0].mxu0
        %v391 = vadd.f32 %v256, %v390
        %v392 = vpop.f32.mrb[0].mxu0
        %v393 = vadd.f32 %v252, %v392
        %v394 = vpop.f32.mrb[0].mxu0
        %v395 = vadd.f32 %v256, %v394
        %396 = vmatprep.mubr.bf16.mxu0 0
        %397 = vmatmul.mubr.bf16.gmra.mrb[0].mxu0 %v327
        %v398 = vpop.f32.mrb[0].mxu0
        %v399 = vadd.f32 %v252, %v398
        %v400 = vpop.f32.mrb[0].mxu0
        %v401 = vadd.f32 %v256, %v400
        %v402 = vpop.f32.mrb[0].mxu0
        %v403 = vadd.f32 %v252, %v402
        %v404 = vpop.f32.mrb[0].mxu0
        %v405 = vadd.f32 %v256, %v404
        %406 = vmatprep.mubr.bf16.mxu0 0
        %407 = vmatmul.mubr.bf16.gmra.mrb[0].mxu0 %v330
        %v408 = vpop.f32.mrb[0].mxu0
        %v409 = vadd.f32 %v252, %v408
        %v410 = vpop.f32.mrb[0].mxu0
        %v411 = vadd.f32 %v256, %v410
        %v412 = vpop.f32.mrb[0].mxu0
        %v413 = vadd.f32 %v252, %v412
        %v414 = vpop.f32.mrb[0].mxu0
        %v415 = vadd.f32 %v256, %v414
        %416 = vmatprep.mubr.bf16.mxu0 0
        %417 = vmatmul.mubr.bf16.gmra.mrb[0].mxu0 %v333
        %v418 = vpop.f32.mrb[0].mxu0
        %v419 = vadd.f32 %v252, %v418
        %v420 = vpop.f32.mrb[0].mxu0
        %v421 = vadd.f32 %v256, %v420
        %v422 = vpop.f32.mrb[0].mxu0
        %v423 = vadd.f32 %v252, %v422
        %v424 = vpop.f32.mrb[0].mxu0
        %v425 = vadd.f32 %v256, %v424
        %426 = vmatprep.mubr.bf16.mxu0 0
        %427 = vmatmul.mubr.bf16.gmra.mrb[0].mxu0 %v336
        %v428 = vpop.f32.mrb[0].mxu0
        %v429 = vadd.f32 %v252, %v428
        %v430 = vpop.f32.mrb[0].mxu0
        %v431 = vadd.f32 %v256, %v430
        %v432 = vpop.f32.mrb[0].mxu0
        %v433 = vadd.f32 %v252, %v432
        %v434 = vpop.f32.mrb[0].mxu0
        %v435 = vadd.f32 %v256, %v434
        %436 = vmatprep.mubr.bf16.mxu0 0
        %437 = vmatmul.mubr.bf16.gmra.mrb[0].mxu0 %v339
        %v438 = vpop.f32.mrb[0].mxu0
        %v439 = vadd.f32 %v252, %v438
        %v440 = vpop.f32.mrb[0].mxu0
        %v441 = vadd.f32 %v256, %v440
        %v442 = vpop.f32.mrb[0].mxu0
        %v443 = vadd.f32 %v252, %v442
        %v444 = vpop.f32.mrb[0].mxu0
        %v445 = vadd.f32 %v256, %v444
        %446 = vmatprep.mubr.bf16.mxu0 0
        %447 = vmatmul.mubr.bf16.gmra.mrb[0].mxu0 %v342
        %v448 = vpop.f32.mrb[0].mxu0
        %v449 = vadd.f32 %v252, %v448
        %v450 = vpop.f32.mrb[0].mxu0
        %v451 = vadd.f32 %v256, %v450
        %v452 = vpop.f32.mrb[0].mxu0
        %v453 = vadd.f32 %v252, %v452
        %v454 = vpop.f32.mrb[0].mxu0
        %v455 = vadd.f32 %v256, %v454
        %456 = vdwg.mxu0
        %v457 = vmax.f32 %v379, 0.0
        %v458 = vmax.f32 %v381, 0.0
        %v459 = vmax.f32 %v383, 0.0
        %v460 = vmax.f32 %v385, 0.0
        %v461 = vmax.f32 %v389, 0.0
        %v462 = vmax.f32 %v391, 0.0
        %v463 = vmax.f32 %v393, 0.0
        %v464 = vmax.f32 %v395, 0.0
        %v465 = vmax.f32 %v399, 0.0
        %v466 = vmax.f32 %v401, 0.0
        %v467 = vmax.f32 %v403, 0.0
        %v468 = vmax.f32 %v405, 0.0
        %v469 = vmax.f32 %v409, 0.0
        %v470 = vmax.f32 %v411, 0.0
        %v471 = vmax.f32 %v413, 0.0
        %v472 = vmax.f32 %v415, 0.0
        %v473 = vmax.f32 %v419, 0.0
        %v474 = vmax.f32 %v421, 0.0
        %v475 = vmax.f32 %v423, 0.0
        %v476 = vmax.f32 %v425, 0.0
        %v477 = vmax.f32 %v429, 0.0
        %v478 = vmax.f32 %v431, 0.0
        %v479 = vmax.f32 %v433, 0.0
        %v480 = vmax.f32 %v435, 0.0
        %v481 = vmax.f32 %v439, 0.0
        %v482 = vmax.f32 %v441, 0.0
        %v483 = vmax.f32 %v443, 0.0
        %v484 = vmax.f32 %v445, 0.0
        %v485 = vmax.f32 %v449, 0.0
        %v486 = vmax.f32 %v451, 0.0
        %v487 = vmax.f32 %v453, 0.0
        %v488 = vmax.f32 %v455, 0.0
        %v489 = vpack.c.bf16 %v459, %v457
        %v490 = vpack.c.bf16 %v460, %v458
        %v491 = vpack.c.bf16 %v463, %v461
        %v492 = vpack.c.bf16 %v464, %v462
        %v493 = vpack.c.bf16 %v467, %v465
        %v494 = vpack.c.bf16 %v468, %v466
        %v495 = vpack.c.bf16 %v471, %v469
        %v496 = vpack.c.bf16 %v472, %v470
        %v497 = vpack.c.bf16 %v475, %v473
        %v498 = vpack.c.bf16 %v476, %v474
        %v499 = vpack.c.bf16 %v479, %v477
        %v500 = vpack.c.bf16 %v480, %v478
        %v501 = vpack.c.bf16 %v483, %v481
        %v502 = vpack.c.bf16 %v484, %v482
        %v503 = vpack.c.bf16 %v487, %v485
        %v504 = vpack.c.bf16 %v488, %v486
        %v505 = vld [vmem:[%s3] sm:$0xf]
        %v506 = vld [vmem:[%s3 + $0x4] sm:$0xf]
        %v507 = vld [vmem:[%s3 + $0x8] sm:$0xf]
        %v508 = vld [vmem:[%s3 + $0xc] sm:$0xf]
        %v509 = vld [vmem:[%s3 + $0x10] sm:$0xf]
        %v510 = vld [vmem:[%s3 + $0x14] sm:$0xf]
        %v511 = vld [vmem:[%s3 + $0x18] sm:$0xf]
        %v512 = vld [vmem:[%s3 + $0x1c] sm:$0xf]
        %v513 = vld [vmem:[%s3 + $0x20] sm:$0xf]
        %v514 = vld [vmem:[%s3 + $0x24] sm:$0xf]
        %v515 = vld [vmem:[%s3 + $0x28] sm:$0xf]
        %v516 = vld [vmem:[%s3 + $0x2c] sm:$0xf]
        %v517 = vld [vmem:[%s3 + $0x30] sm:$0xf]
        %v518 = vld [vmem:[%s3 + $0x34] sm:$0xf]
        %v519 = vld [vmem:[%s3 + $0x38] sm:$0xf]
        %v520 = vld [vmem:[%s3 + $0x3c] sm:$0xf]
        %v521 = vld [vmem:[%s3 + $0x40] sm:$0xf]
        %v522 = vld [vmem:[%s3 + $0x44] sm:$0xf]
        %v523 = vld [vmem:[%s3 + $0x48] sm:$0xf]
        %v524 = vld [vmem:[%s3 + $0x4c] sm:$0xf]
        %v525 = vld [vmem:[%s3 + $0x50] sm:$0xf]
        %v526 = vld [vmem:[%s3 + $0x54] sm:$0xf]
        %v527 = vld [vmem:[%s3 + $0x58] sm:$0xf]
        %v528 = vld [vmem:[%s3 + $0x5c] sm:$0xf]
        %v529 = vld [vmem:[%s3 + $0x60] sm:$0xf]
        %v530 = vld [vmem:[%s3 + $0x64] sm:$0xf]
        %v531 = vld [vmem:[%s3 + $0x68] sm:$0xf]
        %v532 = vld [vmem:[%s3 + $0x6c] sm:$0xf]
        %v533 = vld [vmem:[%s3 + $0x70] sm:$0xf]
        %v534 = vld [vmem:[%s3 + $0x74] sm:$0xf]
        %v535 = vld [vmem:[%s3 + $0x78] sm:$0xf]
        %v536 = vld [vmem:[%s3 + $0x7c] sm:$0xf]
        %v537 = vld [vmem:[%s4] sm:$0x1]
        %v539 = vlaneseq
        %v540 = vshrl.u32 %v539, 7
        %v541 = vsub.s32 0, %v540
        %v542 = vrot.slane %v537, %v541
        %v576 = vunpack.c.l.b16 %v505
        %v577 = vunpack.c.l.b16 %v506
        %v578 = vunpack.c.l.b16 %v507
        %v579 = vunpack.c.l.b16 %v508
        %v580 = vunpack.c.l.b16 %v509
        %v581 = vunpack.c.l.b16 %v510
        %v582 = vunpack.c.l.b16 %v511
        %v583 = vunpack.c.l.b16 %v512
        %v584 = vunpack.c.l.b16 %v513
        %v585 = vunpack.c.l.b16 %v514
        %v586 = vunpack.c.l.b16 %v515
        %v587 = vunpack.c.l.b16 %v516
        %v588 = vunpack.c.l.b16 %v517
        %v589 = vunpack.c.l.b16 %v518
        %v590 = vunpack.c.l.b16 %v519
        %v591 = vunpack.c.l.b16 %v520
        %v592 = vunpack.c.l.b16 %v521
        %v593 = vunpack.c.l.b16 %v522
        %v594 = vunpack.c.l.b16 %v523
        %v595 = vunpack.c.l.b16 %v524
        %v596 = vunpack.c.l.b16 %v525
        %v597 = vunpack.c.l.b16 %v526
        %v598 = vunpack.c.l.b16 %v527
        %v599 = vunpack.c.l.b16 %v528
        %v600 = vunpack.c.l.b16 %v529
        %v601 = vunpack.c.l.b16 %v530
        %v602 = vunpack.c.l.b16 %v531
        %v603 = vunpack.c.l.b16 %v532
        %v604 = vunpack.c.l.b16 %v533
        %v605 = vunpack.c.l.b16 %v534
        %v606 = vunpack.c.l.b16 %v535
        %v607 = vunpack.c.l.b16 %v536
        %v608 = vpack.c.b16 %v577, %v576
        %v609 = vpack.c.b16 %v579, %v578
        %v610 = vpack.c.b16 %v581, %v580
        %v611 = vpack.c.b16 %v583, %v582
        %v612 = vpack.c.b16 %v585, %v584
        %v613 = vpack.c.b16 %v587, %v586
        %v614 = vpack.c.b16 %v589, %v588
        %v615 = vpack.c.b16 %v591, %v590
        %v616 = vpack.c.b16 %v593, %v592
        %v617 = vpack.c.b16 %v595, %v594
        %v618 = vpack.c.b16 %v597, %v596
        %v619 = vpack.c.b16 %v599, %v598
        %v620 = vpack.c.b16 %v601, %v600
        %v621 = vpack.c.b16 %v603, %v602
        %v622 = vpack.c.b16 %v605, %v604
        %v623 = vpack.c.b16 %v607, %v606
        %640 = vmatprep.subr.bf16.mxu0 0
        %641 = vmatpush1.bf16.msra.mxu0 %v608
        %642 = vmatprep.subr.bf16.mxu0 0
        %643 = vmatpush1.bf16.msra.mxu0 %v609
        %644 = vmatprep.subr.bf16.mxu0 0
        %645 = vmatpush1.bf16.msra.mxu0 %v610
        %646 = vmatprep.subr.bf16.mxu0 0
        %647 = vmatpush1.bf16.msra.mxu0 %v611
        %648 = vmatprep.subr.bf16.mxu0 0
        %649 = vmatpush1.bf16.msra.mxu0 %v612
        %650 = vmatprep.subr.bf16.mxu0 0
        %651 = vmatpush1.bf16.msra.mxu0 %v613
        %652 = vmatprep.subr.bf16.mxu0 0
        %653 = vmatpush1.bf16.msra.mxu0 %v614
        %654 = vmatprep.subr.bf16.mxu0 0
        %655 = vmatpush1.bf16.msra.mxu0 %v615
        %656 = vmatprep.subr.bf16.mxu0 0
        %657 = vmatpush1.bf16.msra.mxu0 %v616
        %658 = vmatprep.subr.bf16.mxu0 0
        %659 = vmatpush1.bf16.msra.mxu0 %v617
        %660 = vmatprep.subr.bf16.mxu0 0
        %661 = vmatpush1.bf16.msra.mxu0 %v618
        %662 = vmatprep.subr.bf16.mxu0 0
        %663 = vmatpush1.bf16.msra.mxu0 %v619
        %664 = vmatprep.subr.bf16.mxu0 0
        %665 = vmatpush1.bf16.msra.mxu0 %v620
        %666 = vmatprep.subr.bf16.mxu0 0
        %667 = vmatpush1.bf16.msra.mxu0 %v621
        %668 = vmatprep.subr.bf16.mxu0 0
        %669 = vmatpush1.bf16.msra.mxu0 %v622
        %670 = vmatprep.subr.bf16.mxu0 0
        %671 = vmatpush1.bf16.msra.mxu0 %v623
        %672 = vmatprep.mubr.bf16.mxu0 %v490
        %673 = vmatmul.mubr.bf16.gmra.mrb[0].mxu0 %v489
        %v674 = vpop.f32.mrb[0].mxu0
        %v675 = vadd.f32 %v542, %v674
        %v676 = vpop.f32.mrb[0].mxu0
        %v677 = vpop.f32.mrb[0].mxu0
        %v678 = vadd.f32 %v542, %v677
        %v679 = vpop.f32.mrb[0].mxu0
        %680 = vmatprep.mubr.bf16.mxu0 %v492
        %681 = vmatmul.mubr.bf16.gmra.mrb[0].mxu0 %v491
        %v682 = vpop.f32.mrb[0].mxu0
        %v683 = vadd.f32 %v542, %v682
        %v684 = vpop.f32.mrb[0].mxu0
        %v685 = vpop.f32.mrb[0].mxu0
        %v686 = vadd.f32 %v542, %v685
        %v687 = vpop.f32.mrb[0].mxu0
        %688 = vmatprep.mubr.bf16.mxu0 %v494
        %689 = vmatmul.mubr.bf16.gmra.mrb[0].mxu0 %v493
        %v690 = vpop.f32.mrb[0].mxu0
        %v691 = vadd.f32 %v542, %v690
        %v692 = vpop.f32.mrb[0].mxu0
        %v693 = vpop.f32.mrb[0].mxu0
        %v694 = vadd.f32 %v542, %v693
        %v695 = vpop.f32.mrb[0].mxu0
        %696 = vmatprep.mubr.bf16.mxu0 %v496
        %697 = vmatmul.mubr.bf16.gmra.mrb[0].mxu0 %v495
        %v698 = vpop.f32.mrb[0].mxu0
        %v699 = vadd.f32 %v542, %v698
        %v700 = vpop.f32.mrb[0].mxu0
        %v701 = vpop.f32.mrb[0].mxu0
        %v702 = vadd.f32 %v542, %v701
        %v703 = vpop.f32.mrb[0].mxu0
        %704 = vmatprep.mubr.bf16.mxu0 %v498
        %705 = vmatmul.mubr.bf16.gmra.mrb[0].mxu0 %v497
        %v706 = vpop.f32.mrb[0].mxu0
        %v707 = vadd.f32 %v542, %v706
        %v708 = vpop.f32.mrb[0].mxu0
        %v709 = vpop.f32.mrb[0].mxu0
        %v710 = vadd.f32 %v542, %v709
        %v711 = vpop.f32.mrb[0].mxu0
        %712 = vmatprep.mubr.bf16.mxu0 %v500
        %713 = vmatmul.mubr.bf16.gmra.mrb[0].mxu0 %v499
        %v714 = vpop.f32.mrb[0].mxu0
        %v715 = vadd.f32 %v542, %v714
        %v716 = vpop.f32.mrb[0].mxu0
        %v717 = vpop.f32.mrb[0].mxu0
        %v718 = vadd.f32 %v542, %v717
        %v719 = vpop.f32.mrb[0].mxu0
        %720 = vmatprep.mubr.bf16.mxu0 %v502
        %721 = vmatmul.mubr.bf16.gmra.mrb[0].mxu0 %v501
        %v722 = vpop.f32.mrb[0].mxu0
        %v723 = vadd.f32 %v542, %v722
        %v724 = vpop.f32.mrb[0].mxu0
        %v725 = vpop.f32.mrb[0].mxu0
        %v726 = vadd.f32 %v542, %v725
        %v727 = vpop.f32.mrb[0].mxu0
        %728 = vmatprep.mubr.bf16.mxu0 %v504
        %729 = vmatmul.mubr.bf16.gmra.mrb[0].mxu0 %v503
        %v730 = vpop.f32.mrb[0].mxu0
        %v731 = vadd.f32 %v542, %v730
        %v732 = vpop.f32.mrb[0].mxu0
        %v733 = vpop.f32.mrb[0].mxu0
        %v734 = vadd.f32 %v542, %v733
        %v735 = vpop.f32.mrb[0].mxu0
        %736 = vdwg.mxu0
        %737 = vst [vmem:[%s218] sm:$0xff] %v675
        %738 = vst [vmem:[%s218 + $0x8] sm:$0xff] %v678
        %739 = vst [vmem:[%s218 + $0x10] sm:$0xff] %v683
        %740 = vst [vmem:[%s218 + $0x18] sm:$0xff] %v686
        %741 = vst [vmem:[%s218 + $0x20] sm:$0xff] %v691
        %742 = vst [vmem:[%s218 + $0x28] sm:$0xff] %v694
        %743 = vst [vmem:[%s218 + $0x30] sm:$0xff] %v699
        %744 = vst [vmem:[%s218 + $0x38] sm:$0xff] %v702
        %745 = vst [vmem:[%s218 + $0x40] sm:$0xff] %v707
        %746 = vst [vmem:[%s218 + $0x48] sm:$0xff] %v710
        %747 = vst [vmem:[%s218 + $0x50] sm:$0xff] %v715
        %748 = vst [vmem:[%s218 + $0x58] sm:$0xff] %v718
        %749 = vst [vmem:[%s218 + $0x60] sm:$0xff] %v723
        %750 = vst [vmem:[%s218 + $0x68] sm:$0xff] %v726
        %751 = vst [vmem:[%s218 + $0x70] sm:$0xff] %v731
        %752 = vst [vmem:[%s218 + $0x78] sm:$0xff] %v734
        %s753 = sand.u32 %s137, 1
        %s754 = scalar_lea.sflag [#allocation3], %s753
        %s755 = sand.u32 %s137, 1
        %s756 = smul.addr %s755, 128
        %s757 = scalar_lea.vmem [#allocation2], %s756
        // Predicated region
        $region41: #{tpu_custom_call.1} parent=39 // pred_check
          %p758 = pneg %p147
        $region42: #{tpu_custom_call.1} parent=39 // pred_check_branch
          %760 = sbr.rel (%p758) target = $region44
        $region43: #{tpu_custom_call.1} parent=39 // pred_region
          %s761 = smul.u32 16, %s19
          %s763 = ssub.s32 2048, 2048
          %764 = vsyncadd %s754, %s763
          %s765 = smul.addr %s761, 128
          %s766 = scalar_lea.hbm %s5, %s765
          %s767 = sshll.u32 %s757, 4
          %s768 = int_to_ptr.vmem [resolvable:$true] %s767
          %773 = dma.vmem_to_hbm [thread:$0]  %s768, 2048, %s766, %s754, 128, 128, 8
        $region44: #{tpu_custom_call.1} parent=39 // pred_fallthru
          _
      $region40: #{tpu_custom_call.1} parent=5 // pred_fallthru
        _
      %p774 = scmp.le.s32.totalorder 2, %s14
      // Predicated region
      $region45: #{tpu_custom_call.1} parent=5 // pred_check
        %p775 = pneg %p774
      $region46: #{tpu_custom_call.1} parent=5 // pred_check_branch
        %777 = sbr.rel (%p775) target = $region48
      $region47: #{tpu_custom_call.1} parent=5 // pred_region
        %s778 = ssub.s32 %s14, 2
        // Predicated region
        $region49: #{tpu_custom_call.1} parent=47 // pred_check
          %p779 = pneg %p153
        $region50: #{tpu_custom_call.1} parent=47 // pred_check_branch
          %781 = sbr.rel (%p779) target = $region52
        $region51: #{tpu_custom_call.1} parent=47 // pred_region
          %s782 = sand.u32 %s138, 1
          %s783 = scalar_lea.sflag [#allocation3], %s782
          %s784 = sand.u32 %s138, 1
          %s785 = smul.addr %s784, 128
          %s786 = scalar_lea.vmem [#allocation2], %s785
          %787 = dma.done %s783, 2048
        $region52: #{tpu_custom_call.1} parent=47 // pred_fallthru
          _
      $region48: #{tpu_custom_call.1} parent=5 // pred_fallthru
        _
    $region6: #{tpu_custom_call.1} parent=1 // loop_footer
      %s18 = sadd.s32 1, %s14
    $region7: #{tpu_custom_call.1} parent=1 // loop_footer_branch
      %13 = sbr.rel target = $region3
    $region8: #{tpu_custom_call.1} parent=1 // loop_exit
      _
    %788 = vsyncpa [#allocation3], 1
    %s789 = scalar_lea.sflag [#allocation3], 1
    %790 = vsyncpa %s789, 1

</llo_original>
